<compile_context>
chip_gen: v7x
topology: tpu7x:2x2x1
jax: 0.10.0
libtpu: 0.0.40
codegen_flags: <defaults>
</compile_context>

<pallas_src>
import functools

import jax
import jax.numpy as jnp
from jax.experimental import pallas as pl
from jax.experimental.pallas import tpu as pltpu


N_BINS = 10


def _round_up(x, m):
    return ((x + m - 1) // m) * m


def _ece_kernel(logits_ref, labels_ref, out_ref, *, n_total, n_bins, tiles_per_split):
    p = pl.program_id(0)   # parallel split (one per TensorCore on v7x)
    i = pl.program_id(1)   # sequential sample-tile within the split

    # Per-split per-bin accumulator lives in the (resident) output block.
    @pl.when(i == 0)
    def _():
        out_ref[...] = jnp.zeros_like(out_ref)

    x = logits_ref[...].astype(jnp.float32)    # (C, TN): classes->sublanes, samples->lanes
    labels = labels_ref[...]                   # (1, TN) int32
    c, tn = x.shape

    # Global sample index of each lane -> validity mask for wrapper-side padding.
    col0 = (p * tiles_per_split + i) * tn
    col = jax.lax.broadcasted_iota(jnp.int32, (1, tn), 1) + col0
    valid = col < n_total                      # (1, TN)

    # ---- confidence without materializing softmax probabilities ----
    # max softmax prob = exp(0) / sum(exp(x - col_max)) = 1 / denom
    col_max = jnp.max(x, axis=0, keepdims=True)                  # (1, TN)
    denom = jnp.sum(jnp.exp(x - col_max), axis=0, keepdims=True)  # (1, TN)
    # approx=True would move the divide to the EUP slot, but can flip samples
    # sitting exactly on a bin boundary vs. the reference; keep exact.
    conf = pl.reciprocal(denom, approx=False)                     # (1, TN)

    # ---- prediction = first argmax over classes (torch.max semantics) ----
    cls = jax.lax.broadcasted_iota(jnp.int32, (c, tn), 0)
    pred = jnp.min(jnp.where(x == col_max, cls, c), axis=0, keepdims=True)  # (1, TN)
    acc = (pred == labels).astype(jnp.float32)                    # (1, TN)

    # ---- digitize confidences into (lower, upper] bins ----
    bin_idx = jnp.clip(
        jnp.ceil(conf * jnp.float32(n_bins)).astype(jnp.int32) - 1, 0, n_bins - 1
    )                                                             # (1, TN)

    # Per-sample signed contribution, zeroed for padded samples.
    diff = jnp.where(valid, conf - acc, jnp.float32(0.0))          # (1, TN)

    # Per-bin signed partial sums: masked select + ONE lane reduction
    # (no f32 one-hot materialization, no extra multiply).
    bins = jax.lax.broadcasted_iota(jnp.int32, (n_bins, tn), 0)
    per_bin = jnp.sum(
        jnp.where(bins == bin_idx, diff, jnp.float32(0.0)), axis=1, keepdims=True
    )                                                             # (n_bins, 1)
    out_ref[...] += per_bin.reshape(1, n_bins, 1)


def ece_loss(logits, labels, *, n_bins=N_BINS, tn=None, n_split=2):
    """logits: (N, C) float (f32/bf16), labels: (N,) int -> (1,) float32 ECE."""
    n, c = logits.shape
    in_bytes = jnp.dtype(logits.dtype).itemsize

    # Per-generation VMEM capacity (128 MiB v5e/v6e, 64 MiB v7x).
    try:
        vmem_cap = int(pltpu.get_tpu_info().vmem_capacity_bytes)
    except Exception:
        vmem_cap = 64 << 20   # conservative default (v7x)

    # Lane-dense layout: classes -> sublanes, samples -> lanes.
    # TODO(synk): on v5e an in-kernel transpose of (TM, C) tiles would avoid
    # the extra HBM pass of this XLA transpose; wrapper transpose kept for
    # simplicity/portability.
    logits_t = logits.T                                    # (C, N)
    labels_row = labels.reshape(1, n).astype(jnp.int32)    # (1, N)

    # Don't use more parallel splits than there is work for.
    n_split = max(1, min(int(n_split), pl.cdiv(n, 512)))

    sub = 16 if in_bytes == 2 else 8
    c_pad_in = _round_up(c, sub)     # sublane-padded classes at input dtype
    c_pad32 = _round_up(c, 8)        # ... after in-kernel f32 upcast
    nb_pad = _round_up(n_bins, 8)

    # Sample-tile width (lanes): as large as ~half the VMEM budget allows.
    if tn is None:
        per_col = (2 * c_pad_in * in_bytes          # double-buffered logits
                   + 2 * 8 * 4                      # double-buffered labels (int32, 8 sublanes)
                   + 4 * max(c_pad32, nb_pad) * 4   # f32 compute temps
                   + 64)                            # assorted (1, TN) vectors
        tn = (vmem_cap // 2) // per_col
        tn = max(512, min(65536, (tn // 512) * 512))
    per_split = pl.cdiv(n, n_split)
    tn = max(512, min(int(tn), _round_up(per_split, 512)))

    tiles_per_split = pl.cdiv(per_split, tn)
    n_pad = n_split * tiles_per_split * tn
    if n_pad > n:
        pad = n_pad - n
        logits_t = jnp.pad(logits_t, ((0, 0), (0, pad)))
        labels_row = jnp.pad(labels_row, ((0, 0), (0, pad)), constant_values=-1)

    kernel = functools.partial(
        _ece_kernel, n_total=n, n_bins=n_bins, tiles_per_split=tiles_per_split
    )

    # Explicit scoped-VMEM limit (v5e default is only 16 MiB).
    need = (2 * (c_pad_in * tn * in_bytes + 8 * tn * 4)
            + 4 * max(c_pad32, nb_pad) * tn * 4 + (2 << 20))
    vmem_limit = int(min(vmem_cap * 3 // 4, max(need, 16 << 20)))

    partials = pl.pallas_call(
        kernel,
        out_shape=jax.ShapeDtypeStruct((n_split, n_bins, 1), jnp.float32),
        grid_spec=pltpu.PrefetchScalarGridSpec(
            num_scalar_prefetch=0,
            grid=(n_split, tiles_per_split),
            in_specs=[
                pl.BlockSpec((c, tn), lambda p, i: (0, p * tiles_per_split + i)),
                pl.BlockSpec((1, tn), lambda p, i: (0, p * tiles_per_split + i)),
            ],
            out_specs=pl.BlockSpec((1, n_bins, 1), lambda p, i: (p, 0, 0)),
        ),
        compiler_params=pltpu.CompilerParams(
            dimension_semantics=("parallel", "arbitrary"),
            vmem_limit_bytes=vmem_limit,
        ),
    )(logits_t, labels_row)

    # Combine signed per-bin sums ACROSS splits first, then abs, then normalize:
    # ECE = sum_b |sum_conf_b - sum_acc_b| / N.
    per_bin = jnp.sum(partials[:, :, 0], axis=0)           # (n_bins,)
    ece = jnp.sum(jnp.abs(per_bin)) * jnp.float32(1.0 / n)
    return ece.reshape(1)


def _ece_reference(logits, labels, n_bins=N_BINS):
    """Plain-JAX reference mirroring the PyTorch module."""
    probs = jax.nn.softmax(logits.astype(jnp.float32), axis=1)
    conf = jnp.max(probs, axis=1)
    pred = jnp.argmax(probs, axis=1)
    acc = (pred == labels).astype(jnp.float32)
    n = logits.shape[0]
    ece = jnp.zeros((1,), jnp.float32)
    for b in range(n_bins):
        lower, upper = b / n_bins, (b + 1) / n_bins
        in_bin = jnp.logical_and(conf > lower, conf <= upper)
        cnt = jnp.sum(in_bin.astype(jnp.float32))
        prop = cnt / n
        sum_conf = jnp.sum(jnp.where(in_bin, conf, 0.0))
        sum_acc = jnp.sum(jnp.where(in_bin, acc, 0.0))
        safe = jnp.maximum(cnt, 1.0)
        gap = jnp.abs(sum_conf / safe - sum_acc / safe)
        ece = ece + jnp.where(cnt > 0, gap * prop, 0.0)
    return ece


if __name__ == "__main__":
    key = jax.random.PRNGKey(0)
    k_logits, k_labels = jax.random.split(key)
    # CIFAR-10-style setup: batch=32, classes=10
    N, C = 32, 10
    logits = jax.random.normal(k_logits, (N, C), dtype=jnp.float32) * 3.0
    labels = jax.random.randint(k_labels, (N,), 0, C, dtype=jnp.int32)

    ece = ece_loss(logits, labels)
    jax.block_until_ready(ece)

    ref = _ece_reference(logits, labels)
    assert jnp.allclose(ece, ref, atol=1e-5, rtol=1e-5), (ece, ref)
    print("KERNEL_OK")
</pallas_src>

<mosaic_0001>
module attributes {stable_mosaic.version = 11 : i64} {
  func.func @_ece_kernel(%arg0: i32, %arg1: i32, %arg2: memref<10x512xf32, #tpu.memory_space<vmem>>, %arg3: memref<1x512xi32, #tpu.memory_space<vmem>>, %arg4: memref<1x10x1xf32, #tpu.memory_space<vmem>>) attributes {dimension_semantics = [#tpu.dimension_semantics<parallel>, #tpu.dimension_semantics<arbitrary>], iteration_bounds = array<i64: 1, 1>, scalar_prefetch = 0 : i64, scratch_operands = 0 : i64, tpu.core_type = #tpu.core_type<tc>, window_params = [{transform_indices = @transform_0, window_bounds = array<i64: 10, 512>}, {transform_indices = @transform_1, window_bounds = array<i64: 1, 512>}, {transform_indices = @transform_2, window_bounds = array<i64: 1, 10, 1>}]} {
    %c0_i32 = arith.constant 0 : i32
    %0 = arith.cmpi eq, %arg1, %c0_i32 : i32
    %1 = arith.extui %0 : i1 to i32
    %c0_i32_0 = arith.constant 0 : i32
    %2 = arith.cmpi ne, %1, %c0_i32_0 : i32
    scf.if %2 {
      %cst_18 = arith.constant 0.000000e+00 : f32
      %57 = vector.broadcast %cst_18 : f32 to vector<1x10x1xf32>
      %c0_19 = arith.constant 0 : index
      %c0_20 = arith.constant 0 : index
      %c0_21 = arith.constant 0 : index
      %58 = vector.load %arg4[%c0_19, %c0_20, %c0_21] : memref<1x10x1xf32, #tpu.memory_space<vmem>>, vector<1x10x1xf32>
      tpu.vector_store %arg4[%c0_19, %c0_20, %c0_21], %57 {strides = array<i32>} : memref<1x10x1xf32, #tpu.memory_space<vmem>>, vector<1x10x1xf32>,
    } else {
    }
    %c0 = arith.constant 0 : index
    %c0_1 = arith.constant 0 : index
    %3 = vector.load %arg2[%c0, %c0_1] : memref<10x512xf32, #tpu.memory_space<vmem>>, vector<10x512xf32>
    %c0_2 = arith.constant 0 : index
    %c0_3 = arith.constant 0 : index
    %4 = vector.load %arg3[%c0_2, %c0_3] : memref<1x512xi32, #tpu.memory_space<vmem>>, vector<1x512xi32>
    %c1_i32 = arith.constant 1 : i32
    %5 = arith.muli %arg0, %c1_i32 : i32
    %6 = arith.addi %5, %arg1 : i32
    %c512_i32 = arith.constant 512 : i32
    %7 = arith.muli %6, %c512_i32 : i32
    %8 = tpu.iota {dimensions = array<i32: 1>} : vector<1x512xi32>
    %9 = vector.broadcast %7 : i32 to vector<1x512xi32>
    %10 = arith.addi %8, %9 : vector<1x512xi32>
    %c32_i32 = arith.constant 32 : i32
    %11 = vector.broadcast %c32_i32 : i32 to vector<1x512xi32>
    %12 = arith.cmpi slt, %10, %11 : vector<1x512xi32>
    %cst = arith.constant dense<0xFF800000> : vector<512xf32>
    %13 = vector.multi_reduction <maximumf>, %3, %cst [0] : vector<10x512xf32> to vector<512xf32>
    %14 = vector.shape_cast %13 : vector<512xf32> to vector<1x512xf32>
    %15 = vector.broadcast %14 : vector<1x512xf32> to vector<10x512xf32>
    %16 = arith.subf %3, %15 : vector<10x512xf32>
    %17 = math.exp %16 : vector<10x512xf32>
    %cst_4 = arith.constant dense<0.000000e+00> : vector<512xf32>
    %18 = vector.multi_reduction <add>, %17, %cst_4 [0] : vector<10x512xf32> to vector<512xf32>
    %19 = vector.shape_cast %18 : vector<512xf32> to vector<1x512xf32>
    %20 = tpu.reciprocal %19 : vector<1x512xf32> -> vector<1x512xf32>
    %21 = tpu.iota {dimensions = array<i32: 0>} : vector<10x512xi32>
    %22 = vector.broadcast %14 : vector<1x512xf32> to vector<10x512xf32>
    %23 = arith.cmpf oeq, %3, %22 : vector<10x512xf32>
    %c10_i32 = arith.constant 10 : i32
    %24 = vector.broadcast %c10_i32 : i32 to vector<10x512xi32>
    %25 = arith.select %23, %21, %24 : vector<10x512xi1>, vector<10x512xi32>
    %cst_5 = arith.constant dense<2147483647> : vector<512xi32>
    %26 = vector.multi_reduction <minsi>, %25, %cst_5 [0] : vector<10x512xi32> to vector<512xi32>
    %27 = vector.shape_cast %26 : vector<512xi32> to vector<1x512xi32>
    %28 = arith.cmpi eq, %27, %4 : vector<1x512xi32>
    %29 = arith.extui %28 : vector<1x512xi1> to vector<1x512xi32>
    %30 = arith.sitofp %29 : vector<1x512xi32> to vector<1x512xf32>
    %cst_6 = arith.constant 1.000000e+01 : f32
    %31 = vector.broadcast %cst_6 : f32 to vector<1x512xf32>
    %32 = arith.mulf %20, %31 : vector<1x512xf32>
    %33 = math.ceil %32 : vector<1x512xf32>
    %34 = arith.fptosi %33 : vector<1x512xf32> to vector<1x512xi32>
    %c1_i32_7 = arith.constant 1 : i32
    %35 = vector.broadcast %c1_i32_7 : i32 to vector<1x512xi32>
    %36 = arith.subi %34, %35 : vector<1x512xi32>
    %c0_i32_8 = arith.constant 0 : i32
    %c9_i32 = arith.constant 9 : i32
    %37 = vector.broadcast %c0_i32_8 : i32 to vector<1x512xi32>
    %38 = arith.maxsi %37, %36 : vector<1x512xi32>
    %39 = vector.broadcast %c9_i32 : i32 to vector<1x512xi32>
    %40 = arith.minsi %39, %38 : vector<1x512xi32>
    %41 = arith.subf %20, %30 : vector<1x512xf32>
    %cst_9 = arith.constant 0.000000e+00 : f32
    %42 = vector.broadcast %cst_9 : f32 to vector<1x512xf32>
    %43 = arith.select %12, %41, %42 : vector<1x512xi1>, vector<1x512xf32>
    %44 = tpu.iota {dimensions = array<i32: 0>} : vector<10x512xi32>
    %45 = vector.broadcast %40 : vector<1x512xi32> to vector<10x512xi32>
    %46 = arith.cmpi eq, %44, %45 : vector<10x512xi32>
    %cst_10 = arith.constant 0.000000e+00 : f32
    %47 = vector.shape_cast %43 : vector<1x512xf32> to vector<1x512xf32>
    %48 = vector.broadcast %47 : vector<1x512xf32> to vector<10x512xf32>
    %49 = vector.broadcast %cst_10 : f32 to vector<10x512xf32>
    %50 = arith.select %46, %48, %49 : vector<10x512xi1>, vector<10x512xf32>
    %cst_11 = arith.constant dense<0.000000e+00> : vector<10xf32>
    %51 = vector.multi_reduction <add>, %50, %cst_11 [1] : vector<10x512xf32> to vector<10xf32>
    %52 = vector.shape_cast %51 : vector<10xf32> to vector<10x1xf32>
    %c0_12 = arith.constant 0 : index
    %c0_13 = arith.constant 0 : index
    %c0_14 = arith.constant 0 : index
    %53 = vector.load %arg4[%c0_12, %c0_13, %c0_14] : memref<1x10x1xf32, #tpu.memory_space<vmem>>, vector<1x10x1xf32>
    %54 = vector.shape_cast %52 : vector<10x1xf32> to vector<1x10x1xf32>
    %55 = arith.addf %53, %54 : vector<1x10x1xf32>
    %c0_15 = arith.constant 0 : index
    %c0_16 = arith.constant 0 : index
    %c0_17 = arith.constant 0 : index
    %56 = vector.load %arg4[%c0_15, %c0_16, %c0_17] : memref<1x10x1xf32, #tpu.memory_space<vmem>>, vector<1x10x1xf32>
    tpu.vector_store %arg4[%c0_15, %c0_16, %c0_17], %55 {strides = array<i32>} : memref<1x10x1xf32, #tpu.memory_space<vmem>>, vector<1x10x1xf32>,
    return
  }
  func.func @transform_0(%arg0: i32, %arg1: i32) -> (i32, i32) {
    %c1_i32 = arith.constant 1 : i32
    %0 = arith.muli %arg0, %c1_i32 : i32
    %1 = arith.addi %0, %arg1 : i32
    %c0_i32 = arith.constant 0 : i32
    %c0_i32_0 = arith.constant 0 : i32
    return %c0_i32, %1 : i32, i32
  }
  func.func @transform_1(%arg0: i32, %arg1: i32) -> (i32, i32) {
    %c1_i32 = arith.constant 1 : i32
    %0 = arith.muli %arg0, %c1_i32 : i32
    %1 = arith.addi %0, %arg1 : i32
    %c0_i32 = arith.constant 0 : i32
    %c0_i32_0 = arith.constant 0 : i32
    return %c0_i32, %1 : i32, i32
  }
  func.func @transform_2(%arg0: i32, %arg1: i32) -> (i32, i32, i32) {
    %c0_i32 = arith.constant 0 : i32
    %c0_i32_0 = arith.constant 0 : i32
    %c0_i32_1 = arith.constant 0 : i32
    return %arg0, %c0_i32, %c0_i32_0 : i32, i32, i32
  }
}

</mosaic_0001>

<llo_original>
// kernel: tpu_custom_call.1
$region0: #{tpu_custom_call.1}
  #allocation0 [shape = 'u32[]', space=smem, size = 0x4, offset = 0x4, fixed_abs, tag = 'smem constant byte address 0x4 - core index']
  #allocation1 [shape = 'u32[144,128]{1,0:T(1,128)}', space=vmem, size = 0x12000, scoped, tag = 'internal scratch']
  %s0 = inlined_call_operand.hbm [shape: f32[10,512], index: 0, kind: input, shape index: {}]
  %s1 = inlined_call_operand.hbm [shape: s32[1,512], index: 1, kind: input, shape index: {}]
  %s2 = inlined_call_operand.vmem [shape: f32[1,10,1], index: 2, kind: output, shape index: {}]
  %s3 = sld [smem:[#allocation0]]
  $region30: #{tpu_custom_call.1} parent=0
    _
  %s5 = ssub.s32 1, %s3
  %s6 = scalar_select 0, %s5, %s3
  $region1: #{tpu_custom_call.1} parent=0
    #allocation2 [shape = 'u8[32768]{0}', space=vmem, size = 0x8000, scoped, tag = 'input window, operand 0, single buffered']
    #allocation3 [shape = 's32[1]{0}', space=sflag, size = 0x4, scoped, tag = 'scoped memory for tpu_custom_call.1']
    #allocation4 [shape = 'u8[2048]{0}', space=vmem, size = 0x800, scoped, tag = 'input window, operand 1, single buffered']
    #allocation5 [shape = 's32[1]{0}', space=sflag, size = 0x4, scoped, tag = 'scoped memory for tpu_custom_call.1']
    %7 = vsyncpa [#allocation3], 0
    %8 = vsyncpa [#allocation5], 0
    // Predicated region
    $region2: #{tpu_custom_call.1} parent=1 // pred_check
      _
    $region3: #{tpu_custom_call.1} parent=1 // pred_check_branch
      %10 = sbr.rel (0) target = $region5
    $region4: #{tpu_custom_call.1} parent=1 // pred_region
      %s11 = sadd.s32 0, 0
      %s12 = smul.u32 4, %s11
      %s14 = ssub.s32 1024, 1024
      %15 = vsyncadd [#allocation3], %s14
      %s16 = smul.addr %s12, 128
      %s17 = scalar_lea.hbm %s0, %s16
      %s18 = sshll.u32 [#allocation2], 4
      %s19 = int_to_ptr.vmem [resolvable:$true] %s18
      %24 = dma.hbm_to_vmem [thread:$0]  %s17, 1024, %s19, [#allocation3], 512, 512, 32
    $region5: #{tpu_custom_call.1} parent=1 // pred_fallthru
      _
    // Predicated region
    $region6: #{tpu_custom_call.1} parent=1 // pred_check
      _
    $region7: #{tpu_custom_call.1} parent=1 // pred_check_branch
      %26 = sbr.rel (0) target = $region9
    $region8: #{tpu_custom_call.1} parent=1 // pred_region
      %s27 = sadd.s32 0, 0
      %s28 = smul.u32 4, %s27
      %s30 = ssub.s32 64, 64
      %31 = vsyncadd [#allocation5], %s30
      %s32 = smul.addr %s28, 16
      %s33 = scalar_lea.hbm %s1, %s32
      %s35 = sshll.u32 [#allocation4], 4
      %s36 = int_to_ptr.vmem [resolvable:$true] %s35
      %38 = dma.hbm_to_vmem [thread:$0]  %s33, 64, %s36, [#allocation5]
    $region9: #{tpu_custom_call.1} parent=1 // pred_fallthru
      _
    // Predicated region
    $region10: #{tpu_custom_call.1} parent=1 // pred_check
      _
    $region11: #{tpu_custom_call.1} parent=1 // pred_check_branch
      %40 = sbr.rel (0) target = $region13
    $region12: #{tpu_custom_call.1} parent=1 // pred_region
      %41 = dma.done [#allocation3], 1024
    $region13: #{tpu_custom_call.1} parent=1 // pred_fallthru
      _
    // Predicated region
    $region14: #{tpu_custom_call.1} parent=1 // pred_check
      _
    $region15: #{tpu_custom_call.1} parent=1 // pred_check_branch
      %43 = sbr.rel (0) target = $region17
    $region16: #{tpu_custom_call.1} parent=1 // pred_region
      %44 = dma.done [#allocation5], 64
    $region17: #{tpu_custom_call.1} parent=1 // pred_fallthru
      _
    %s45 = sadd.s32 0, 0
    %s46 = smul.u32 4, %s45
    %s47 = sadd.s32 0, 0
    %s48 = smul.u32 4, %s47
    %p49 = scmp.eq.s32.totalorder 0, 0
    // Predicated region
    $region18: #{tpu_custom_call.1} parent=1 // pred_check
      %p50 = pneg %p49
    $region19: #{tpu_custom_call.1} parent=1 // pred_check_branch
      %52 = sbr.rel (%p50) target = $region21
    $region20: #{tpu_custom_call.1} parent=1 // pred_region
      %vm53 = vcmask 7168
      %54 = vst.msk [vmem:[%s2] sm:$0xff] %vm53, 0.0
      %vm55 = vcmask 1024
      %56 = vst.msk [vmem:[%s2 + $0x8] sm:$0x3] %vm55, 0.0
    $region21: #{tpu_custom_call.1} parent=1 // pred_fallthru
      _
    %v57 = vld [vmem:[#allocation2] sm:$0xff]
    %v58 = vld [vmem:[#allocation2 + $0x8] sm:$0xff]
    %v59 = vld [vmem:[#allocation2 + $0x10] sm:$0xff]
    %v60 = vld [vmem:[#allocation2 + $0x18] sm:$0xff]
    %v61 = vld [vmem:[#allocation2 + $0x20] sm:$0x3]
    %v62 = vld [vmem:[#allocation2 + $0x28] sm:$0x3]
    %v63 = vld [vmem:[#allocation2 + $0x30] sm:$0x3]
    %v64 = vld [vmem:[#allocation2 + $0x38] sm:$0x3]
    %v65 = vld [vmem:[#allocation4] sm:$0xf]
    %s66 = sadd.s32 0, 0
    %s67 = smul.u32 %s66, 512
    %v68 = vlaneseq
    %v69 = vand.u32 %v68, 127
    %v70 = vadd.s32 %v69, 128
    %v71 = vadd.s32 %v69, 256
    %v72 = vadd.s32 %v69, 384
    %v73 = vstv %s67
    %v74 = vadd.s32 %v69, %v73
    %v75 = vadd.s32 %v70, %v73
    %v76 = vadd.s32 %v71, %v73
    %v77 = vadd.s32 %v72, %v73
    %vm78 = vcmp.lt.s32.totalorder %v74, 32
    %vm79 = vcmp.lt.s32.totalorder %v75, 32
    %vm80 = vcmp.lt.s32.totalorder %v76, 32
    %vm81 = vcmp.lt.s32.totalorder %v77, 32
    %vm82 = vcmask 1041408
    %v83 = vsel %vm82, %v61, -inf
    %v84 = vmax.f32 %v57, %v83
    %v85 = vrot.slane %v84, 4
    %v86 = vmax.f32 %v84, %v85
    %v87 = vrot.slane %v86, 2
    %v88 = vmax.f32 %v86, %v87
    %v89 = vrot.slane %v88, 1
    %v90 = vmax.f32 %v88, %v89
    %v91 = vsel %vm82, %v62, -inf
    %v92 = vmax.f32 %v58, %v91
    %v93 = vrot.slane %v92, 4
    %v94 = vmax.f32 %v92, %v93
    %v95 = vrot.slane %v94, 2
    %v96 = vmax.f32 %v94, %v95
    %v97 = vrot.slane %v96, 1
    %v98 = vmax.f32 %v96, %v97
    %v99 = vsel %vm82, %v63, -inf
    %v100 = vmax.f32 %v59, %v99
    %v101 = vrot.slane %v100, 4
    %v102 = vmax.f32 %v100, %v101
    %v103 = vrot.slane %v102, 2
    %v104 = vmax.f32 %v102, %v103
    %v105 = vrot.slane %v104, 1
    %v106 = vmax.f32 %v104, %v105
    %v107 = vsel %vm82, %v64, -inf
    %v108 = vmax.f32 %v60, %v107
    %v109 = vrot.slane %v108, 4
    %v110 = vmax.f32 %v108, %v109
    %v111 = vrot.slane %v110, 2
    %v112 = vmax.f32 %v110, %v111
    %v113 = vrot.slane %v112, 1
    %v114 = vmax.f32 %v112, %v113
    %v115 = vsub.f32 %v57, %v90
    %v116 = vsub.f32 %v58, %v98
    %v117 = vsub.f32 %v59, %v106
    %v118 = vsub.f32 %v60, %v114
    %v119 = vsub.f32 %v61, %v90
    %v120 = vsub.f32 %v62, %v98
    %v121 = vsub.f32 %v63, %v106
    %v122 = vsub.f32 %v64, %v114
    %v123 = vmul.f32 %v115, 1.442695
    %v124 = vpow.pop %v123
    %v125 = vmul.f32 %v116, 1.442695
    %v126 = vpow.pop %v125
    %v127 = vmul.f32 %v117, 1.442695
    %v128 = vpow.pop %v127
    %v129 = vmul.f32 %v118, 1.442695
    %v130 = vpow.pop %v129
    %v131 = vmul.f32 %v119, 1.442695
    %v132 = vpow.pop %v131
    %v133 = vmul.f32 %v120, 1.442695
    %v134 = vpow.pop %v133
    %v135 = vmul.f32 %v121, 1.442695
    %v136 = vpow.pop %v135
    %v137 = vmul.f32 %v122, 1.442695
    %v138 = vpow.pop %v137
    %v139 = vsel %vm82, %v132, 0.0
    %v140 = vadd.f32 %v124, %v139
    %v141 = vrot.slane %v140, 4
    %v142 = vadd.f32 %v140, %v141
    %v143 = vrot.slane %v142, 2
    %v144 = vadd.f32 %v142, %v143
    %v145 = vrot.slane %v144, 1
    %v146 = vadd.f32 %v144, %v145
    %v147 = vsel %vm82, %v134, 0.0
    %v148 = vadd.f32 %v126, %v147
    %v149 = vrot.slane %v148, 4
    %v150 = vadd.f32 %v148, %v149
    %v151 = vrot.slane %v150, 2
    %v152 = vadd.f32 %v150, %v151
    %v153 = vrot.slane %v152, 1
    %v154 = vadd.f32 %v152, %v153
    %v155 = vsel %vm82, %v136, 0.0
    %v156 = vadd.f32 %v128, %v155
    %v157 = vrot.slane %v156, 4
    %v158 = vadd.f32 %v156, %v157
    %v159 = vrot.slane %v158, 2
    %v160 = vadd.f32 %v158, %v159
    %v161 = vrot.slane %v160, 1
    %v162 = vadd.f32 %v160, %v161
    %v163 = vsel %vm82, %v138, 0.0
    %v164 = vadd.f32 %v130, %v163
    %v165 = vrot.slane %v164, 4
    %v166 = vadd.f32 %v164, %v165
    %v167 = vrot.slane %v166, 2
    %v168 = vadd.f32 %v166, %v167
    %v169 = vrot.slane %v168, 1
    %v170 = vadd.f32 %v168, %v169
    %v171 = vrcp.pop %v146
    %v172 = vrcp.pop %v154
    %v173 = vrcp.pop %v162
    %v174 = vrcp.pop %v170
    %v175 = vlaneseq
    %v176 = vshrl.u32 %v175, 7
    %v177 = vadd.s32 %v176, 8
    %vm178 = vcmp.eq.f32.partialorder %v57, %v90
    %vm179 = vcmp.eq.f32.partialorder %v58, %v98
    %vm180 = vcmp.eq.f32.partialorder %v59, %v106
    %vm181 = vcmp.eq.f32.partialorder %v60, %v114
    %vm182 = vcmp.eq.f32.partialorder %v61, %v90
    %vm183 = vcmp.eq.f32.partialorder %v62, %v98
    %vm184 = vcmp.eq.f32.partialorder %v63, %v106
    %vm185 = vcmp.eq.f32.partialorder %v64, %v114
    %v186 = vsel %vm178, %v176, 10
    %v187 = vsel %vm179, %v176, 10
    %v188 = vsel %vm180, %v176, 10
    %v189 = vsel %vm181, %v176, 10
    %v190 = vsel %vm182, %v177, 10
    %v191 = vsel %vm183, %v177, 10
    %v192 = vsel %vm184, %v177, 10
    %v193 = vsel %vm185, %v177, 10
    %v194 = vsel %vm82, %v190, 2147483647
    %vm195 = vcmp.lt.s32.totalorder %v186, %v194
    %v196 = vsel %vm195, %v186, %v194
    %v197 = vrot.slane %v196, 4
    %vm198 = vcmp.lt.s32.totalorder %v196, %v197
    %v199 = vsel %vm198, %v196, %v197
    %v200 = vrot.slane %v199, 2
    %vm201 = vcmp.lt.s32.totalorder %v199, %v200
    %v202 = vsel %vm201, %v199, %v200
    %v203 = vrot.slane %v202, 1
    %vm204 = vcmp.lt.s32.totalorder %v202, %v203
    %v205 = vsel %vm204, %v202, %v203
    %v206 = vsel %vm82, %v191, 2147483647
    %vm207 = vcmp.lt.s32.totalorder %v187, %v206
    %v208 = vsel %vm207, %v187, %v206
    %v209 = vrot.slane %v208, 4
    %vm210 = vcmp.lt.s32.totalorder %v208, %v209
    %v211 = vsel %vm210, %v208, %v209
    %v212 = vrot.slane %v211, 2
    %vm213 = vcmp.lt.s32.totalorder %v211, %v212
    %v214 = vsel %vm213, %v211, %v212
    %v215 = vrot.slane %v214, 1
    %vm216 = vcmp.lt.s32.totalorder %v214, %v215
    %v217 = vsel %vm216, %v214, %v215
    %v218 = vsel %vm82, %v192, 2147483647
    %vm219 = vcmp.lt.s32.totalorder %v188, %v218
    %v220 = vsel %vm219, %v188, %v218
    %v221 = vrot.slane %v220, 4
    %vm222 = vcmp.lt.s32.totalorder %v220, %v221
    %v223 = vsel %vm222, %v220, %v221
    %v224 = vrot.slane %v223, 2
    %vm225 = vcmp.lt.s32.totalorder %v223, %v224
    %v226 = vsel %vm225, %v223, %v224
    %v227 = vrot.slane %v226, 1
    %vm228 = vcmp.lt.s32.totalorder %v226, %v227
    %v229 = vsel %vm228, %v226, %v227
    %v230 = vsel %vm82, %v193, 2147483647
    %vm231 = vcmp.lt.s32.totalorder %v189, %v230
    %v232 = vsel %vm231, %v189, %v230
    %v233 = vrot.slane %v232, 4
    %vm234 = vcmp.lt.s32.totalorder %v232, %v233
    %v235 = vsel %vm234, %v232, %v233
    %v236 = vrot.slane %v235, 2
    %vm237 = vcmp.lt.s32.totalorder %v235, %v236
    %v238 = vsel %vm237, %v235, %v236
    %v239 = vrot.slane %v238, 1
    %vm240 = vcmp.lt.s32.totalorder %v238, %v239
    %v241 = vsel %vm240, %v238, %v239
    %v242 = vlaneseq
    %v243 = vshrl.u32 %v242, 7
    %v244 = vsub.s32 0, %v243
    %v245 = vrot.slane %v65, %v244
    %v246 = vlaneseq
    %v247 = vshrl.u32 %v246, 7
    %v248 = vsub.s32 1, %v247
    %v249 = vrot.slane %v65, %v248
    %v250 = vlaneseq
    %v251 = vshrl.u32 %v250, 7
    %v252 = vsub.s32 2, %v251
    %v253 = vrot.slane %v65, %v252
    %v254 = vlaneseq
    %v255 = vshrl.u32 %v254, 7
    %v256 = vsub.s32 3, %v255
    %v257 = vrot.slane %v65, %v256
    %vm258 = vcmp.eq.s32.totalorder %v205, %v245
    %vm259 = vcmp.eq.s32.totalorder %v217, %v249
    %vm260 = vcmp.eq.s32.totalorder %v229, %v253
    %vm261 = vcmp.eq.s32.totalorder %v241, %v257
    %v262 = vsel %vm258, 1, 0
    %v263 = vsel %vm259, 1, 0
    %v264 = vsel %vm260, 1, 0
    %v265 = vsel %vm261, 1, 0
    %v266 = vcvt.s32.f32 %v262
    %v267 = vcvt.s32.f32 %v263
    %v268 = vcvt.s32.f32 %v264
    %v269 = vcvt.s32.f32 %v265
    %v270 = vmul.f32 %v171, 10.0
    %v271 = vmul.f32 %v172, 10.0
    %v272 = vmul.f32 %v173, 10.0
    %v273 = vmul.f32 %v174, 10.0
    %v274 = vceil.f32 %v270
    %v275 = vceil.f32 %v271
    %v276 = vceil.f32 %v272
    %v277 = vceil.f32 %v273
    %v278 = vcvt.f32.s32.to.zero.pseudo %v274
    %v279 = vcvt.f32.s32.to.zero.pseudo %v275
    %v280 = vcvt.f32.s32.to.zero.pseudo %v276
    %v281 = vcvt.f32.s32.to.zero.pseudo %v277
    %v282 = vsub.s32 %v278, 1
    %v283 = vsub.s32 %v279, 1
    %v284 = vsub.s32 %v280, 1
    %v285 = vsub.s32 %v281, 1
    %vm286 = vcmp.gt.s32.totalorder %v282, 0
    %v287 = vsel %vm286, %v282, 0
    %vm288 = vcmp.gt.s32.totalorder %v283, 0
    %v289 = vsel %vm288, %v283, 0
    %vm290 = vcmp.gt.s32.totalorder %v284, 0
    %v291 = vsel %vm290, %v284, 0
    %vm292 = vcmp.gt.s32.totalorder %v285, 0
    %v293 = vsel %vm292, %v285, 0
    %vm294 = vcmp.lt.s32.totalorder %v287, 9
    %v295 = vsel %vm294, %v287, 9
    %vm296 = vcmp.lt.s32.totalorder %v289, 9
    %v297 = vsel %vm296, %v289, 9
    %vm298 = vcmp.lt.s32.totalorder %v291, 9
    %v299 = vsel %vm298, %v291, 9
    %vm300 = vcmp.lt.s32.totalorder %v293, 9
    %v301 = vsel %vm300, %v293, 9
    %v302 = vsub.f32 %v171, %v266
    %v303 = vsub.f32 %v172, %v267
    %v304 = vsub.f32 %v173, %v268
    %v305 = vsub.f32 %v174, %v269
    %v306 = vsel %vm78, %v302, 0.0
    %v307 = vsel %vm79, %v303, 0.0
    %v308 = vsel %vm80, %v304, 0.0
    %v309 = vsel %vm81, %v305, 0.0
    %vm310 = vcmp.eq.s32.totalorder %v176, %v295
    %vm311 = vcmp.eq.s32.totalorder %v176, %v297
    %vm312 = vcmp.eq.s32.totalorder %v176, %v299
    %vm313 = vcmp.eq.s32.totalorder %v176, %v301
    %vm314 = vcmp.eq.s32.totalorder %v177, %v295
    %vm315 = vcmp.eq.s32.totalorder %v177, %v297
    %vm316 = vcmp.eq.s32.totalorder %v177, %v299
    %vm317 = vcmp.eq.s32.totalorder %v177, %v301
    %v318 = vlaneseq
    %v319 = vshrl.u32 %v318, 7
    %v320 = vsub.s32 0, %v319
    %v321 = vrot.slane %v306, %v320
    %v322 = vlaneseq
    %v323 = vshrl.u32 %v322, 7
    %v324 = vsub.s32 0, %v323
    %v325 = vrot.slane %v307, %v324
    %v326 = vlaneseq
    %v327 = vshrl.u32 %v326, 7
    %v328 = vsub.s32 0, %v327
    %v329 = vrot.slane %v308, %v328
    %v330 = vlaneseq
    %v331 = vshrl.u32 %v330, 7
    %v332 = vsub.s32 0, %v331
    %v333 = vrot.slane %v309, %v332
    %v334 = vsel %vm310, %v321, 0.0
    %v335 = vsel %vm311, %v325, 0.0
    %v336 = vsel %vm312, %v329, 0.0
    %v337 = vsel %vm313, %v333, 0.0
    %v338 = vsel %vm314, %v321, 0.0
    %v339 = vsel %vm315, %v325, 0.0
    %v340 = vsel %vm316, %v329, 0.0
    %v341 = vsel %vm317, %v333, 0.0
    %v342 = vadd.f32 %v334, %v335
    %v343 = vadd.f32 %v342, %v336
    %v344 = vadd.f32 %v343, %v337
    %345 = vadd.xlane.f32.xlu0 %v344
    %v346 = vpop.xlane.xlu0 %345
    %v347 = vsel %vm82, %v338, 0.0
    %v348 = vsel %vm82, %v339, 0.0
    %v349 = vadd.f32 %v347, %v348
    %v350 = vsel %vm82, %v340, 0.0
    %v351 = vadd.f32 %v349, %v350
    %v352 = vsel %vm82, %v341, 0.0
    %v353 = vadd.f32 %v351, %v352
    %354 = vadd.xlane.f32.xlu0 %v353
    %v355 = vpop.xlane.xlu0 %354
    %v356 = vld [vmem:[%s2] sm:$0xff]
    %v357 = vld [vmem:[%s2 + $0x8] sm:$0x3]
    %v358 = vadd.f32 %v356, %v346
    %v359 = vadd.f32 %v357, %v355
    %vm360 = vcmask 7168
    %361 = vst.msk [vmem:[%s2] sm:$0xff] %vm360, %v358
    %vm362 = vcmask 1024
    %363 = vst.msk [vmem:[%s2 + $0x8] sm:$0x3] %vm362, %v359
    // Predicated region
    $region22: #{tpu_custom_call.1} parent=1 // pred_check
      _
    $region23: #{tpu_custom_call.1} parent=1 // pred_check_branch
      %365 = sbr.rel (0) target = $region25
    $region24: #{tpu_custom_call.1} parent=1 // pred_region
      _
    $region25: #{tpu_custom_call.1} parent=1 // pred_fallthru
      _
    // Predicated region
    $region26: #{tpu_custom_call.1} parent=1 // pred_check
      _
    $region27: #{tpu_custom_call.1} parent=1 // pred_check_branch
      %367 = sbr.rel (0) target = $region29
    $region28: #{tpu_custom_call.1} parent=1 // pred_region
      _
    $region29: #{tpu_custom_call.1} parent=1 // pred_fallthru
      _
    %368 = vsyncpa [#allocation3], 1
    %369 = vsyncpa [#allocation5], 1

</llo_original>
